<compile_context>
chip_gen: v6e
topology: v6e:2x2x1
jax: 0.10.0
libtpu: 0.0.40
codegen_flags: <defaults>
</compile_context>

<pallas_src>
import math

import jax
import jax.numpy as jnp
from jax.experimental import pallas as pl
from jax.experimental.pallas import tpu as pltpu


# -----------------------------------------------------------------------------
# Kernel body (shared by all paths).
#   coef_ref : SMEM (4,) float32 scalars [a, b, c, d]
#   x_ref    : VMEM input tile
#   o_ref    : VMEM output tile (dtype = caller's floating dtype)
# Horner form ((d*x + c)*x + b)*x + a -> 6 VPU ops per vreg; compute in f32 and
# cast on the store so bf16 callers keep bf16 HBM traffic.
# -----------------------------------------------------------------------------
def _poly3_kernel(coef_ref, x_ref, o_ref):
    a = coef_ref[0]
    b = coef_ref[1]
    c = coef_ref[2]
    d = coef_ref[3]
    x = x_ref[...].astype(jnp.float32)
    y = ((d * x + c) * x + b) * x + a
    o_ref[...] = y.astype(o_ref.dtype)


# Tiling parameters -----------------------------------------------------------
_LANE = 1024                    # lane-dense row width (multiple of 128)
_ROWS = 1024                    # 1024 x 1024 f32 = 4 MiB per block
_SINGLE_BLOCK_MAX = 256 * 1024  # <= 256K elements: one block, no grid
_RAGGED_LANE_BLOCK = 128 * 1024 # ragged fallback: (1, n) view, lane-dim blocks
# 4 MiB blocks, double buffered, in + out -> ~16 MiB resident.  32 MiB keeps
# headroom on v6e/v7x (32 MiB scoped default) and explicitly raises v5e's
# 16 MiB default so the larger tiles do not hit the scoped-VMEM limit there.
_VMEM_LIMIT_BYTES = 32 * 1024 * 1024


def _cost(n_elems, itemsize):
    # 3 mul + 3 add per element (Horner); bytes = read x + write y (+ coef).
    return pl.CostEstimate(
        flops=6 * n_elems,
        bytes_accessed=2 * n_elems * itemsize + 16,
        transcendentals=0,
    )


def _forward_single_block(coef, x_flat, io_dtype, itemsize):
    # Small inputs (the tutorial's N=2000 case): a single block with NO grid ->
    # zero per-step overhead.  Present the (tiny, possibly padded) array as a
    # lane-dense (8, n_pad // 8) slab so the output store is unmasked.
    n = x_flat.size
    n_pad = max(_LANE, pl.cdiv(n, _LANE) * _LANE)
    padded = n_pad != n
    x_in = jnp.pad(x_flat, (0, n_pad - n)) if padded else x_flat
    x2d = x_in.reshape(8, n_pad // 8)
    out = pl.pallas_call(
        _poly3_kernel,
        out_shape=jax.ShapeDtypeStruct(x2d.shape, io_dtype),
        in_specs=[
            pl.BlockSpec(memory_space=pltpu.SMEM),   # coefficients
            pl.BlockSpec(memory_space=pltpu.VMEM),   # whole x, one block
        ],
        out_specs=pl.BlockSpec(memory_space=pltpu.VMEM),
        cost_estimate=_cost(n_pad, itemsize),
    )(coef, x2d)
    out_flat = out.reshape(-1)
    return out_flat[:n] if padded else out_flat


def _forward_tiled_2d(coef, x_flat, io_dtype, itemsize):
    # Large n with n % 1024 == 0: metadata-only reshape to (rows, 1024) -- no
    # pad/unpad HBM copies -- then a pipelined 1-D grid of 4 MiB blocks.
    # pl.cdiv + Pallas boundary masking handle rows % _ROWS != 0 without any
    # wrapper-side padding.  "parallel" shards grid steps across v7x's two TCs.
    n = x_flat.size
    rows = n // _LANE
    x2d = x_flat.reshape(rows, _LANE)
    out = pl.pallas_call(
        _poly3_kernel,
        out_shape=jax.ShapeDtypeStruct((rows, _LANE), io_dtype),
        grid=(pl.cdiv(rows, _ROWS),),
        in_specs=[
            pl.BlockSpec(memory_space=pltpu.SMEM),             # coefficients
            pl.BlockSpec((_ROWS, _LANE), lambda i: (i, 0)),    # x tile
        ],
        out_specs=pl.BlockSpec((_ROWS, _LANE), lambda i: (i, 0)),
        compiler_params=pltpu.CompilerParams(
            dimension_semantics=("parallel",),
            vmem_limit_bytes=_VMEM_LIMIT_BYTES,
        ),
        cost_estimate=_cost(n, itemsize),
    )(coef, x2d)
    return out.reshape(-1)


def _forward_tiled_ragged(coef, x_flat, io_dtype, itemsize):
    # Large n NOT divisible by 1024: view the flat array as (1, n) (free) and
    # block along the lane dimension with a pl.cdiv grid; Pallas masks the
    # ragged last block.  Still zero extra HBM copies; the single-sublane view
    # costs some vreg efficiency, but the kernel is HBM-bound so bandwidth, not
    # VALU, remains the roofline.
    n = x_flat.size
    x2d = x_flat.reshape(1, n)
    out = pl.pallas_call(
        _poly3_kernel,
        out_shape=jax.ShapeDtypeStruct((1, n), io_dtype),
        grid=(pl.cdiv(n, _RAGGED_LANE_BLOCK),),
        in_specs=[
            pl.BlockSpec(memory_space=pltpu.SMEM),
            pl.BlockSpec((1, _RAGGED_LANE_BLOCK), lambda i: (0, i)),
        ],
        out_specs=pl.BlockSpec((1, _RAGGED_LANE_BLOCK), lambda i: (0, i)),
        compiler_params=pltpu.CompilerParams(
            dimension_semantics=("parallel",),
            vmem_limit_bytes=_VMEM_LIMIT_BYTES,
        ),
        cost_estimate=_cost(n, itemsize),
    )(coef, x2d)
    return out.reshape(-1)


@jax.jit
def polynomial3_forward(x, a, b, c, d):
    """y = a + b*x + c*x^2 + d*x^3 elementwise via Pallas TPU kernels."""
    orig_shape = x.shape
    # Preserve floating I/O dtype (bf16 in -> bf16 out); promote ints to f32.
    io_dtype = x.dtype if jnp.issubdtype(x.dtype, jnp.floating) else jnp.float32
    x_flat = x.reshape(-1).astype(io_dtype)       # contiguous reshape: metadata only
    n = x_flat.size
    itemsize = jnp.dtype(io_dtype).itemsize
    coef = jnp.stack([a, b, c, d]).astype(jnp.float32)   # (4,) scalars -> SMEM

    if n <= _SINGLE_BLOCK_MAX:
        out_flat = _forward_single_block(coef, x_flat, io_dtype, itemsize)
    elif n % _LANE == 0:
        out_flat = _forward_tiled_2d(coef, x_flat, io_dtype, itemsize)
    else:
        out_flat = _forward_tiled_ragged(coef, x_flat, io_dtype, itemsize)
    return out_flat.reshape(orig_shape)


if __name__ == "__main__":
    # --- Tutorial case: x = linspace(-pi, pi, 2000), params ~ randn(()) ------
    N = 2000
    x = jnp.linspace(-math.pi, math.pi, N, dtype=jnp.float32)

    key = jax.random.PRNGKey(0)
    ka, kb, kc, kd, kx = jax.random.split(key, 5)
    a = jax.random.normal(ka, (), dtype=jnp.float32)
    b = jax.random.normal(kb, (), dtype=jnp.float32)
    c = jax.random.normal(kc, (), dtype=jnp.float32)
    d = jax.random.normal(kd, (), dtype=jnp.float32)

    y = jax.block_until_ready(polynomial3_forward(x, a, b, c, d))
    y_ref = a + b * x + c * x**2 + d * x**3
    assert y.shape == x.shape and y.dtype == x.dtype
    assert jnp.allclose(y, y_ref, atol=1e-5, rtol=1e-5)

    # --- Exercise the tiled large-n path once (still quick: ~4.4 MB): zero-copy
    #     reshape, pl.cdiv grid (2 steps, masked partial last block), 4 MiB tiles.
    n_big = 1100 * _LANE                      # rows = 1100 -> grid = 2, partial block
    x_big = jax.random.normal(kx, (n_big,), dtype=jnp.float32)
    y_big = jax.block_until_ready(polynomial3_forward(x_big, a, b, c, d))
    y_big_ref = a + b * x_big + c * x_big**2 + d * x_big**3
    assert jnp.allclose(y_big, y_big_ref, atol=1e-4, rtol=1e-5)

    print("KERNEL_OK")
</pallas_src>

<mosaic_0001>
module attributes {stable_mosaic.version = 11 : i64} {
  func.func @_poly3_kernel(%arg0: memref<4xf32, #tpu.memory_space<smem>>, %arg1: memref<8x256xf32, #tpu.memory_space<vmem>>, %arg2: memref<8x256xf32, #tpu.memory_space<vmem>>) attributes {dimension_semantics = [], scalar_prefetch = 0 : i64, scratch_operands = 0 : i64, tpu.core_type = #tpu.core_type<tc>} {
    %c0 = arith.constant 0 : index
    %0 = memref.load %arg0[%c0] : memref<4xf32, #tpu.memory_space<smem>>
    %c1 = arith.constant 1 : index
    %1 = memref.load %arg0[%c1] : memref<4xf32, #tpu.memory_space<smem>>
    %c2 = arith.constant 2 : index
    %2 = memref.load %arg0[%c2] : memref<4xf32, #tpu.memory_space<smem>>
    %c3 = arith.constant 3 : index
    %3 = memref.load %arg0[%c3] : memref<4xf32, #tpu.memory_space<smem>>
    %c0_0 = arith.constant 0 : index
    %c0_1 = arith.constant 0 : index
    %4 = vector.load %arg1[%c0_0, %c0_1] : memref<8x256xf32, #tpu.memory_space<vmem>>, vector<8x256xf32>
    %5 = vector.broadcast %3 : f32 to vector<8x256xf32>
    %6 = arith.mulf %5, %4 : vector<8x256xf32>
    %7 = vector.broadcast %2 : f32 to vector<8x256xf32>
    %8 = arith.addf %6, %7 : vector<8x256xf32>
    %9 = arith.mulf %8, %4 : vector<8x256xf32>
    %10 = vector.broadcast %1 : f32 to vector<8x256xf32>
    %11 = arith.addf %9, %10 : vector<8x256xf32>
    %12 = arith.mulf %11, %4 : vector<8x256xf32>
    %13 = vector.broadcast %0 : f32 to vector<8x256xf32>
    %14 = arith.addf %12, %13 : vector<8x256xf32>
    %c0_2 = arith.constant 0 : index
    %c0_3 = arith.constant 0 : index
    %15 = vector.load %arg2[%c0_2, %c0_3] : memref<8x256xf32, #tpu.memory_space<vmem>>, vector<8x256xf32>
    tpu.vector_store %arg2[%c0_2, %c0_3], %14 {strides = array<i32>} : memref<8x256xf32, #tpu.memory_space<vmem>>, vector<8x256xf32>,
    return
  }
}

</mosaic_0001>

<llo_original>
// kernel: polynomial3_forward.1
$region0: #{polynomial3_forward.1}
  #allocation0 [shape = 'u32[]', space=smem, size = 0x4, offset = 0x4, fixed_abs, tag = 'smem constant byte address 0x4 - core index']
  #allocation1 [shape = 'u32[144,128]{1,0:T(1,128)}', space=vmem, size = 0x12000, scoped, tag = 'internal scratch']
  %s0 = inlined_call_operand.vmem [shape: f32[4], index: 0, kind: input, shape index: {}]
  %s1 = inlined_call_operand.vmem [shape: f32[8,256], index: 1, kind: input, shape index: {}]
  %s2 = inlined_call_operand.vmem [shape: f32[8,256], index: 2, kind: output, shape index: {}]
  %s3 = sld [smem:[#allocation0]]
  $region22: #{polynomial3_forward.1} parent=0
    _
  %s5 = ssub.s32 1, %s3
  %s6 = scalar_select 0, %s5, %s3
  $region1: #{polynomial3_forward.1} parent=0
    #allocation2 [shape = 'u8[512]{0}', space=smem, size = 0x200, scoped, tag = 'input window, operand 0, single buffered']
    #allocation3 [shape = 's32[1]{0}', space=sflag, size = 0x4, scoped, tag = 'scoped memory for polynomial3_forward.1']
    %7 = vsyncpa [#allocation3], 0
    // Predicated region
    $region2: #{polynomial3_forward.1} parent=1 // pred_check
      _
    $region3: #{polynomial3_forward.1} parent=1 // pred_check_branch
      %9 = sbr.rel (0) target = $region5
    $region4: #{polynomial3_forward.1} parent=1 // pred_region
      %s11 = ssub.s32 16, 16
      %12 = vsyncadd [#allocation3], %s11
      %s14 = sshll.u32 %s0, 4
      %s15 = int_to_ptr.vmem [resolvable:$true] %s14
      %17 = dma.vmem_to_smem %s15, 16, [#allocation2], [#allocation3]
    $region5: #{polynomial3_forward.1} parent=1 // pred_fallthru
      _
    // Predicated region
    $region6: #{polynomial3_forward.1} parent=1 // pred_check
      _
    $region7: #{polynomial3_forward.1} parent=1 // pred_check_branch
      %19 = sbr.rel (0) target = $region9
    $region8: #{polynomial3_forward.1} parent=1 // pred_region
      _
    $region9: #{polynomial3_forward.1} parent=1 // pred_fallthru
      _
    // Predicated region
    $region10: #{polynomial3_forward.1} parent=1 // pred_check
      _
    $region11: #{polynomial3_forward.1} parent=1 // pred_check_branch
      %21 = sbr.rel (0) target = $region13
    $region12: #{polynomial3_forward.1} parent=1 // pred_region
      %22 = dma.done [#allocation3], 16
    $region13: #{polynomial3_forward.1} parent=1 // pred_fallthru
      _
    %23 = sfence
    %s24 = sld [smem:[#allocation2]]
    %s25 = sld [smem:[#allocation2 + $0x1]]
    %s26 = sld [smem:[#allocation2 + $0x2]]
    %s27 = sld [smem:[#allocation2 + $0x3]]
    %v28 = vld [vmem:[%s1] sm:$0xff]
    %v29 = vld [vmem:[%s1 + $0x8] sm:$0xff]
    %v30 = vstv %s27
    %v31 = vmul.f32 %v30, %v28
    %v32 = vmul.f32 %v30, %v29
    %v33 = vstv %s26
    %v34 = vadd.f32 %v31, %v33
    %v35 = vadd.f32 %v32, %v33
    %v36 = vmul.f32 %v34, %v28
    %v37 = vmul.f32 %v35, %v29
    %v38 = vstv %s25
    %v39 = vadd.f32 %v36, %v38
    %v40 = vadd.f32 %v37, %v38
    %v41 = vmul.f32 %v39, %v28
    %v42 = vmul.f32 %v40, %v29
    %v43 = vstv %s24
    %v44 = vadd.f32 %v41, %v43
    %v45 = vadd.f32 %v42, %v43
    %46 = vst [vmem:[%s2] sm:$0xff] %v44
    %47 = vst [vmem:[%s2 + $0x8] sm:$0xff] %v45
    // Predicated region
    $region14: #{polynomial3_forward.1} parent=1 // pred_check
      _
    $region15: #{polynomial3_forward.1} parent=1 // pred_check_branch
      %49 = sbr.rel (0) target = $region17
    $region16: #{polynomial3_forward.1} parent=1 // pred_region
      _
    $region17: #{polynomial3_forward.1} parent=1 // pred_fallthru
      _
    // Predicated region
    $region18: #{polynomial3_forward.1} parent=1 // pred_check
      _
    $region19: #{polynomial3_forward.1} parent=1 // pred_check_branch
      %51 = sbr.rel (0) target = $region21
    $region20: #{polynomial3_forward.1} parent=1 // pred_region
      _
    $region21: #{polynomial3_forward.1} parent=1 // pred_fallthru
      _
    %52 = vsyncpa [#allocation3], 1

</llo_original>
